<compile_context>
chip_gen: v6e
topology: v6e:2x2x1
jax: 0.10.0
libtpu: 0.0.40
codegen_flags: <defaults>
</compile_context>

<pallas_src>
import jax
import jax.numpy as jnp
from jax.experimental import pallas as pl
from jax.experimental.pallas import tpu as pltpu


_LANE = 128
_SUBLANE = 8
_PER_BUFFER_BYTES = 2 * 1024 * 1024  # target padded VMEM bytes per input block


def _ru(x, m):
    return (x + m - 1) // m * m


def _num_tensorcores():
    """Best-effort TensorCore count (2 on v7x, 1 on v5e/v6e); falls back to 1."""
    # TODO(synk): verify the CORE_PARALLEL split actually engages both v7x
    # TensorCores; could not be validated on a single-core sandbox.
    try:
        info = pltpu.get_tpu_info()
    except Exception:
        return 1
    for name in ("num_tensorcores", "tensorcores_per_chip",
                 "tensor_cores_per_chip", "num_tensor_cores"):
        v = getattr(info, name, None)
        if v is None or isinstance(v, bool):
            continue
        try:
            v = int(v)
        except (TypeError, ValueError):
            continue
        if 1 <= v <= 8:
            return v
    return 1


def _tree_sum_leading(x):
    """Log-depth pairwise sum over axis 0 (axis length is a power of two)."""
    while x.shape[0] > 1:
        m = x.shape[0] // 2
        x = x[:m] + x[m:]
    return x[0]


def _make_kernel(loss_type, Tm1, spp, nb_full, inv_e, gate_overflow):
    def kernel(off_ref, pos_ref, mov_ref, out_ref, acc_ref):
        c = pl.program_id(0)
        i = pl.program_id(1)

        @pl.when(i == 0)
        def _init():
            acc_ref[...] = jnp.zeros_like(acc_ref)

        off = off_ref[...].astype(jnp.float32)            # (TB, T-1, D)
        mov = mov_ref[...].astype(jnp.float32)            # (TB, T-1, D)
        pos = pos_ref[:, 0:Tm1, :].astype(jnp.float32)    # positions[:, :-1] in-kernel

        s = pos + mov + off
        contrib = jnp.abs(s) if loss_type == "l1" else s * s

        # Collapse the batch-block axis with a log-depth tree of VPU adds;
        # only a small (T-1, D) accumulator is read-modified-written per step.
        red = _tree_sum_leading(contrib)

        if gate_overflow:
            # Last part may have a few duplicated (clamped) steps: skip them.
            @pl.when(c * spp + i < nb_full)
            def _acc():
                acc_ref[...] += red
        else:
            acc_ref[...] += red

        @pl.when(i == spp - 1)
        def _fin():
            # One cross-sublane/lane reduce per part, off the steady-state path.
            out_ref[...] = (jnp.sum(acc_ref[...], keepdims=True)
                            * jnp.float32(inv_e))

    return kernel


def _run_pallas(offset, positions, mov_sl, *, loss_type, tb, nb_full, parts, inv_e):
    B, T, D = positions.shape
    Tm1 = T - 1
    spp = -(-nb_full // parts)                 # steps per part
    gate_overflow = parts * spp > nb_full

    if gate_overflow:
        def blk(c, i):
            return jnp.minimum(c * spp + i, nb_full - 1)
    else:
        def blk(c, i):
            return c * spp + i

    def idx3(c, i):
        return (blk(c, i), 0, 0)

    kernel = _make_kernel(loss_type, Tm1, spp, nb_full, inv_e, gate_overflow)

    itemsize = max(offset.dtype.itemsize, positions.dtype.itemsize,
                   mov_sl.dtype.itemsize)
    blk_pos = tb * _ru(T, _SUBLANE) * _ru(D, _LANE) * itemsize
    blk_om = tb * _ru(Tm1, _SUBLANE) * _ru(D, _LANE) * itemsize
    acc_bytes = _ru(Tm1, _SUBLANE) * _ru(D, _LANE) * 4
    need = 2 * (blk_pos + 2 * blk_om) + acc_bytes + (2 << 20)
    vmem_limit = int(min(max(32 << 20, need), 128 << 20))

    if parts > 1:
        sems = (pltpu.CORE_PARALLEL, pltpu.ARBITRARY)
    else:
        sems = ("arbitrary", "arbitrary")

    return pl.pallas_call(
        kernel,
        out_shape=jax.ShapeDtypeStruct((parts, 1, 1), jnp.float32),
        grid_spec=pltpu.PrefetchScalarGridSpec(
            num_scalar_prefetch=0,
            grid=(parts, spp),
            in_specs=[
                pl.BlockSpec((tb, Tm1, D), idx3),   # offset   [B, T-1, D]
                pl.BlockSpec((tb, T, D), idx3),     # positions[B, T,   D] (sliced in-kernel)
                pl.BlockSpec((tb, Tm1, D), idx3),   # movement[:, 1:, -1]  [B, T-1, D]
            ],
            out_specs=pl.BlockSpec((None, 1, 1), lambda c, i: (c, 0, 0)),
            scratch_shapes=[pltpu.VMEM((Tm1, D), jnp.float32)],
        ),
        compiler_params=pltpu.CompilerParams(
            dimension_semantics=sems, vmem_limit_bytes=vmem_limit),
    )(offset, positions, mov_sl)


def trace_loss(offset, positions, movement, loss_type: str = "l2"):
    """JAX/Pallas equivalent of TraceLoss.forward (mean reduction).

    offset:    [B, T-1, D]
    positions: [B, T,   D]
    movement:  [B, T, S, D]
    """
    B, T, D = positions.shape
    Tm1 = T - 1
    E = B * Tm1 * D
    inv_e = 1.0 / float(E)

    # TODO(synk): movement[:, 1:, -1] is a strided gather across the S axis; it
    # is materialized by one XLA copy here (a direct BlockSpec read would need
    # element-offset specs on a squeezed axis).
    mov_sl = movement[:, 1:, -1]               # [B, T-1, D]

    # Batch tile: largest power of two whose padded VMEM block stays ~2 MiB.
    itemsize = max(offset.dtype.itemsize, positions.dtype.itemsize,
                   movement.dtype.itemsize)
    per_batch = _ru(T, _SUBLANE) * _ru(D, _LANE) * itemsize
    tb = max(1, min(B, _PER_BUFFER_BYTES // per_batch))
    tb = 1 << (tb.bit_length() - 1)            # power-of-two floor (tree reduce)
    nb_full = B // tb
    tail = B - nb_full * tb

    parts = max(1, min(_num_tensorcores(), nb_full))

    kwargs = dict(loss_type=loss_type, tb=tb, nb_full=nb_full, inv_e=inv_e)
    try:
        out = _run_pallas(offset, positions, mov_sl, parts=parts, **kwargs)
        if parts > 1:
            out = jax.block_until_ready(out)   # surface failures -> fall back
    except Exception:
        if parts == 1:
            raise
        out = _run_pallas(offset, positions, mov_sl, parts=1, **kwargs)

    loss = jnp.sum(out)                        # 1-2 scalars; negligible

    if tail:
        # Ragged batch remainder (< one batch block): tiny, plain JAX.
        s = (positions[nb_full * tb:, :Tm1].astype(jnp.float32)
             + mov_sl[nb_full * tb:].astype(jnp.float32)
             + offset[nb_full * tb:].astype(jnp.float32))
        tail_contrib = jnp.abs(s) if loss_type == "l1" else s * s
        loss = loss + jnp.sum(tail_contrib) * jnp.float32(inv_e)

    return loss


def trace_loss_ref(offset, positions, movement, loss_type: str = "l2"):
    target = -1.0 * (positions[:, :-1] + movement[:, 1:, -1])
    diff = target - offset
    if loss_type == "l1":
        return jnp.mean(jnp.abs(diff))
    return jnp.mean(diff * diff)


if __name__ == "__main__":
    key = jax.random.PRNGKey(0)
    # (B, T, S, D): second config exercises batch tiling + ragged-tail path.
    configs = [(2, 8, 4, 32), (5, 9, 3, 48)]

    for (B, T, S, D) in configs:
        key, k1, k2, k3 = jax.random.split(key, 4)
        positions = jax.random.normal(k1, (B, T, D), dtype=jnp.float32)
        movement = jax.random.normal(k2, (B, T, S, D), dtype=jnp.float32)
        offset = jax.random.normal(k3, (B, T - 1, D), dtype=jnp.float32)

        for lt in ("l2", "l1"):
            got = jax.block_until_ready(
                trace_loss(offset, positions, movement, loss_type=lt))
            want = trace_loss_ref(offset, positions, movement, loss_type=lt)
            assert jnp.allclose(got, want, rtol=1e-5, atol=1e-5), \
                (B, T, S, D, lt, got, want)

    print("KERNEL_OK")
</pallas_src>

<mosaic_0001>
module attributes {stable_mosaic.version = 11 : i64} {
  func.func @kernel(%arg0: i32, %arg1: i32, %arg2: memref<2x7x32xf32, #tpu.memory_space<vmem>>, %arg3: memref<2x8x32xf32, #tpu.memory_space<vmem>>, %arg4: memref<2x7x32xf32, #tpu.memory_space<vmem>>, %arg5: memref<1x1x1xf32, #tpu.memory_space<vmem>>, %arg6: memref<7x32xf32, #tpu.memory_space<vmem>>) attributes {dimension_semantics = [#tpu.dimension_semantics<arbitrary>, #tpu.dimension_semantics<arbitrary>], iteration_bounds = array<i64: 1, 1>, scalar_prefetch = 0 : i64, scratch_operands = 1 : i64, tpu.core_type = #tpu.core_type<tc>, window_params = [{transform_indices = @transform_0, window_bounds = array<i64: 2, 7, 32>}, {transform_indices = @transform_1, window_bounds = array<i64: 2, 8, 32>}, {transform_indices = @transform_2, window_bounds = array<i64: 2, 7, 32>}, {transform_indices = @transform_3, window_bounds = array<i64: 1, 1, 1>}]} {
    %c0_i32 = arith.constant 0 : i32
    %0 = arith.cmpi eq, %arg1, %c0_i32 : i32
    %1 = arith.extui %0 : i1 to i32
    %c0_i32_0 = arith.constant 0 : i32
    %2 = arith.cmpi ne, %1, %c0_i32_0 : i32
    scf.if %2 {
      %cst = arith.constant 0.000000e+00 : f32
      %19 = vector.broadcast %cst : f32 to vector<7x32xf32>
      %c0_15 = arith.constant 0 : index
      %c0_16 = arith.constant 0 : index
      %20 = vector.load %arg6[%c0_15, %c0_16] : memref<7x32xf32, #tpu.memory_space<vmem>>, vector<7x32xf32>
      tpu.vector_store %arg6[%c0_15, %c0_16], %19 {strides = array<i32>} : memref<7x32xf32, #tpu.memory_space<vmem>>, vector<7x32xf32>,
    } else {
    }
    %c0 = arith.constant 0 : index
    %c0_1 = arith.constant 0 : index
    %c0_2 = arith.constant 0 : index
    %3 = vector.load %arg2[%c0, %c0_1, %c0_2] : memref<2x7x32xf32, #tpu.memory_space<vmem>>, vector<2x7x32xf32>
    %c0_3 = arith.constant 0 : index
    %c0_4 = arith.constant 0 : index
    %c0_5 = arith.constant 0 : index
    %4 = vector.load %arg4[%c0_3, %c0_4, %c0_5] : memref<2x7x32xf32, #tpu.memory_space<vmem>>, vector<2x7x32xf32>
    %c0_6 = arith.constant 0 : index
    %c0_7 = arith.constant 0 : index
    %c0_8 = arith.constant 0 : index
    %5 = vector.load %arg3[%c0_6, %c0_7, %c0_8] : memref<2x8x32xf32, #tpu.memory_space<vmem>>, vector<2x7x32xf32>
    %6 = arith.addf %5, %4 : vector<2x7x32xf32>
    %7 = arith.addf %6, %3 : vector<2x7x32xf32>
    %8 = arith.mulf %7, %7 : vector<2x7x32xf32>
    %9 = vector.extract_strided_slice %8 {offsets = [0, 0, 0], sizes = [1, 7, 32], strides = [1, 1, 1]} : vector<2x7x32xf32> to vector<1x7x32xf32>
    %10 = vector.extract_strided_slice %8 {offsets = [1, 0, 0], sizes = [1, 7, 32], strides = [1, 1, 1]} : vector<2x7x32xf32> to vector<1x7x32xf32>
    %11 = arith.addf %9, %10 : vector<1x7x32xf32>
    %12 = vector.shape_cast %11 : vector<1x7x32xf32> to vector<7x32xf32>
    %c0_9 = arith.constant 0 : index
    %c0_10 = arith.constant 0 : index
    %13 = vector.load %arg6[%c0_9, %c0_10] : memref<7x32xf32, #tpu.memory_space<vmem>>, vector<7x32xf32>
    %14 = arith.addf %13, %12 : vector<7x32xf32>
    %c0_11 = arith.constant 0 : index
    %c0_12 = arith.constant 0 : index
    %15 = vector.load %arg6[%c0_11, %c0_12] : memref<7x32xf32, #tpu.memory_space<vmem>>, vector<7x32xf32>
    tpu.vector_store %arg6[%c0_11, %c0_12], %14 {strides = array<i32>} : memref<7x32xf32, #tpu.memory_space<vmem>>, vector<7x32xf32>,
    %c0_i32_13 = arith.constant 0 : i32
    %16 = arith.cmpi eq, %arg1, %c0_i32_13 : i32
    %17 = arith.extui %16 : i1 to i32
    %c0_i32_14 = arith.constant 0 : i32
    %18 = arith.cmpi ne, %17, %c0_i32_14 : i32
    scf.if %18 {
      %c0_15 = arith.constant 0 : index
      %c0_16 = arith.constant 0 : index
      %19 = vector.load %arg6[%c0_15, %c0_16] : memref<7x32xf32, #tpu.memory_space<vmem>>, vector<7x32xf32>
      %20 = vector.shape_cast %19 : vector<7x32xf32> to vector<1x7x32xf32>
      %cst = arith.constant dense<0.000000e+00> : vector<1xf32>
      %21 = vector.multi_reduction <add>, %20, %cst [1, 2] : vector<1x7x32xf32> to vector<1xf32>
      %22 = vector.shape_cast %21 : vector<1xf32> to vector<1x1x1xf32>
      %23 = vector.extract %22[0, 0, 0] : f32 from vector<1x1x1xf32>
      %24 = vector.broadcast %23 : f32 to vector<1x1xf32>
      %cst_17 = arith.constant 0.00223214296 : f32
      %25 = vector.broadcast %cst_17 : f32 to vector<1x1xf32>
      %26 = arith.mulf %24, %25 : vector<1x1xf32>
      %c0_18 = arith.constant 0 : index
      %c0_19 = arith.constant 0 : index
      %c0_20 = arith.constant 0 : index
      %27 = vector.load %arg5[%c0_18, %c0_19, %c0_20] : memref<1x1x1xf32, #tpu.memory_space<vmem>>, vector<1x1x1xf32>
      %28 = vector.shape_cast %27 : vector<1x1x1xf32> to vector<1x1xf32>
      %29 = vector.shape_cast %26 : vector<1x1xf32> to vector<1x1x1xf32>
      tpu.vector_store %arg5[%c0_18, %c0_19, %c0_20], %29 {strides = array<i32>} : memref<1x1x1xf32, #tpu.memory_space<vmem>>, vector<1x1x1xf32>,
    } else {
    }
    return
  }
  func.func @transform_0(%arg0: i32, %arg1: i32) -> (i32, i32, i32) {
    %c1_i32 = arith.constant 1 : i32
    %0 = arith.muli %arg0, %c1_i32 : i32
    %1 = arith.addi %0, %arg1 : i32
    %c0_i32 = arith.constant 0 : i32
    %c0_i32_0 = arith.constant 0 : i32
    %c0_i32_1 = arith.constant 0 : i32
    return %1, %c0_i32, %c0_i32_0 : i32, i32, i32
  }
  func.func @transform_1(%arg0: i32, %arg1: i32) -> (i32, i32, i32) {
    %c1_i32 = arith.constant 1 : i32
    %0 = arith.muli %arg0, %c1_i32 : i32
    %1 = arith.addi %0, %arg1 : i32
    %c0_i32 = arith.constant 0 : i32
    %c0_i32_0 = arith.constant 0 : i32
    %c0_i32_1 = arith.constant 0 : i32
    return %1, %c0_i32, %c0_i32_0 : i32, i32, i32
  }
  func.func @transform_2(%arg0: i32, %arg1: i32) -> (i32, i32, i32) {
    %c1_i32 = arith.constant 1 : i32
    %0 = arith.muli %arg0, %c1_i32 : i32
    %1 = arith.addi %0, %arg1 : i32
    %c0_i32 = arith.constant 0 : i32
    %c0_i32_0 = arith.constant 0 : i32
    %c0_i32_1 = arith.constant 0 : i32
    return %1, %c0_i32, %c0_i32_0 : i32, i32, i32
  }
  func.func @transform_3(%arg0: i32, %arg1: i32) -> (i32, i32, i32) {
    %c0_i32 = arith.constant 0 : i32
    %c0_i32_0 = arith.constant 0 : i32
    %c0_i32_1 = arith.constant 0 : i32
    return %arg0, %c0_i32, %c0_i32_0 : i32, i32, i32
  }
}

</mosaic_0001>

<llo_original>
// kernel: tpu_custom_call.1
$region0: #{tpu_custom_call.1}
  #allocation0 [shape = 'u32[]', space=smem, size = 0x4, offset = 0x4, fixed_abs, tag = 'smem constant byte address 0x4 - core index']
  #allocation1 [shape = 'u32[144,128]{1,0:T(1,128)}', space=vmem, size = 0x12000, scoped, tag = 'internal scratch']
  #allocation2 [shape = 'f32[7,32]{1,0:T(8,128)}', space=vmem, size = 0x1000, scoped, tag = 'scratch operand']
  %s0 = inlined_call_operand.vmem [shape: f32[2,7,32], index: 0, kind: input, shape index: {}]
  %s1 = inlined_call_operand.vmem [shape: f32[2,8,32], index: 1, kind: input, shape index: {}]
  %s2 = inlined_call_operand.vmem [shape: f32[2,7,32], index: 2, kind: input, shape index: {}]
  %s3 = inlined_call_operand.hbm [shape: f32[1,1,1], index: 3, kind: output, shape index: {}]
  %s4 = sld [smem:[#allocation0]]
  $region30: #{tpu_custom_call.1} parent=0
    _
  %s6 = ssub.s32 1, %s4
  %s7 = scalar_select 0, %s6, %s4
  $region1: #{tpu_custom_call.1} parent=0
    #allocation3 [shape = 'u8[512]{0}', space=vmem, size = 0x400, scoped, tag = 'output window, operand 0, single buffered']
    #allocation4 [shape = 's32[1]{0}', space=sflag, size = 0x4, scoped, tag = 'scoped memory for tpu_custom_call.1']
    %8 = vsyncpa [#allocation4], 0
    // Predicated region
    $region2: #{tpu_custom_call.1} parent=1 // pred_check
      _
    $region3: #{tpu_custom_call.1} parent=1 // pred_check_branch
      %10 = sbr.rel (0) target = $region5
    $region4: #{tpu_custom_call.1} parent=1 // pred_region
      %s11 = sadd.s32 0, 0
      %s12 = smul.u32 2, %s11
      %p13 = scmp.lt.s32.totalorder %s12, 1
      %s14 = scalar_select %p13, %s12, 1
      %s15 = smul.addr %s14, 8
      %s16 = scalar_lea.vmem %s0, %s15
      %s17 = sadd.s32 0, 0
      %s18 = smul.u32 2, %s17
    $region5: #{tpu_custom_call.1} parent=1 // pred_fallthru
      _
    // Predicated region
    $region6: #{tpu_custom_call.1} parent=1 // pred_check
      _
    $region7: #{tpu_custom_call.1} parent=1 // pred_check_branch
      %20 = sbr.rel (0) target = $region9
    $region8: #{tpu_custom_call.1} parent=1 // pred_region
      %s21 = sadd.s32 0, 0
      %s22 = smul.u32 2, %s21
      %p23 = scmp.lt.s32.totalorder %s22, 1
      %s24 = scalar_select %p23, %s22, 1
      %s25 = smul.addr %s24, 8
      %s26 = scalar_lea.vmem %s1, %s25
      %s27 = sadd.s32 0, 0
      %s28 = smul.u32 2, %s27
    $region9: #{tpu_custom_call.1} parent=1 // pred_fallthru
      _
    // Predicated region
    $region10: #{tpu_custom_call.1} parent=1 // pred_check
      _
    $region11: #{tpu_custom_call.1} parent=1 // pred_check_branch
      %30 = sbr.rel (0) target = $region13
    $region12: #{tpu_custom_call.1} parent=1 // pred_region
      %s31 = sadd.s32 0, 0
      %s32 = smul.u32 2, %s31
      %p33 = scmp.lt.s32.totalorder %s32, 1
      %s34 = scalar_select %p33, %s32, 1
      %s35 = smul.addr %s34, 8
      %s36 = scalar_lea.vmem %s2, %s35
      %s37 = sadd.s32 0, 0
      %s38 = smul.u32 2, %s37
    $region13: #{tpu_custom_call.1} parent=1 // pred_fallthru
      _
    %s39 = sadd.s32 0, 0
    %s40 = smul.u32 2, %s39
    %p41 = scmp.lt.s32.totalorder %s40, 1
    %s42 = scalar_select %p41, %s40, 1
    %s43 = smul.addr %s42, 8
    %s44 = scalar_lea.vmem %s0, %s43
    %s45 = sadd.s32 0, 0
    %s46 = smul.u32 2, %s45
    %p47 = scmp.lt.s32.totalorder %s46, 1
    %s48 = scalar_select %p47, %s46, 1
    %s49 = smul.addr %s48, 8
    %s50 = scalar_lea.vmem %s1, %s49
    %s51 = sadd.s32 0, 0
    %s52 = smul.u32 2, %s51
    %p53 = scmp.lt.s32.totalorder %s52, 1
    %s54 = scalar_select %p53, %s52, 1
    %s55 = smul.addr %s54, 8
    %s56 = scalar_lea.vmem %s2, %s55
    %s57 = sadd.s32 0, 0
    %s58 = smul.u32 2, %s57
    %p59 = scmp.lt.s32.totalorder %s58, 1
    %s60 = scalar_select %p59, %s58, 1
    %s61 = smul.addr %s60, 8
    %s62 = scalar_lea.vmem %s0, %s61
    %s63 = sadd.s32 0, 0
    %s64 = smul.u32 2, %s63
    %s65 = sadd.s32 0, 0
    %s66 = smul.u32 2, %s65
    %p67 = scmp.lt.s32.totalorder %s66, 1
    %s68 = scalar_select %p67, %s66, 1
    %s69 = smul.addr %s68, 8
    %s70 = scalar_lea.vmem %s1, %s69
    %s71 = sadd.s32 0, 0
    %s72 = smul.u32 2, %s71
    %s73 = sadd.s32 0, 0
    %s74 = smul.u32 2, %s73
    %p75 = scmp.lt.s32.totalorder %s74, 1
    %s76 = scalar_select %p75, %s74, 1
    %s77 = smul.addr %s76, 8
    %s78 = scalar_lea.vmem %s2, %s77
    %s79 = sadd.s32 0, 0
    %s80 = smul.u32 2, %s79
    %p81 = scmp.eq.s32.totalorder 0, 0
    // Predicated region
    $region14: #{tpu_custom_call.1} parent=1 // pred_check
      %p82 = pneg %p81
    $region15: #{tpu_custom_call.1} parent=1 // pred_check_branch
      %84 = sbr.rel (%p82) target = $region17
    $region16: #{tpu_custom_call.1} parent=1 // pred_region
      %vm85 = vcmask 260096
      %86 = vst.msk [vmem:[#allocation2] sm:$0x7f] %vm85, 0.0
    $region17: #{tpu_custom_call.1} parent=1 // pred_fallthru
      _
    %v87 = vld [vmem:[%s62] sm:$0x7f]
    %v88 = vld [vmem:[%s62 + $0x8] sm:$0x7f]
    %v89 = vld [vmem:[%s78] sm:$0x7f]
    %v90 = vld [vmem:[%s78 + $0x8] sm:$0x7f]
    %v91 = vld [vmem:[%s70] sm:$0x7f]
    %v92 = vld [vmem:[%s70 + $0x8] sm:$0x7f]
    %v93 = vadd.f32 %v91, %v89
    %v94 = vadd.f32 %v92, %v90
    %v95 = vadd.f32 %v93, %v87
    %v96 = vadd.f32 %v94, %v88
    %v97 = vmul.f32 %v95, %v95
    %v98 = vmul.f32 %v96, %v96
    %v99 = vadd.f32 %v97, %v98
    %v100 = vld [vmem:[#allocation2] sm:$0x7f]
    %v101 = vadd.f32 %v100, %v99
    %vm102 = vcmask 260096
    %103 = vst.msk [vmem:[#allocation2] sm:$0x7f] %vm102, %v101
    // Predicated region
    $region18: #{tpu_custom_call.1} parent=1 // pred_check
      %p104 = pneg %p81
    $region19: #{tpu_custom_call.1} parent=1 // pred_check_branch
      %106 = sbr.rel (%p104) target = $region21
    $region20: #{tpu_custom_call.1} parent=1 // pred_region
      %v107 = vld [vmem:[#allocation2] sm:$0x7f]
      %v108 = vsel %vm102, %v107, 0.0
      %109 = vadd.xlane.f32.xlu0 %v108
      %v110 = vpop.xlane.xlu0 %109
      %v111 = vrot.slane %v110, 4
      %v112 = vadd.f32 %v110, %v111
      %v113 = vrot.slane %v112, 2
      %v114 = vadd.f32 %v112, %v113
      %v115 = vrot.slane %v114, 1
      %v116 = vadd.f32 %v114, %v115
      %s117 = vtos %v116
      %v118 = vstv %s117
      %v119 = vmul.f32 %v118, 0.002232143
      %vm120 = vcmask 0
      %121 = vst.msk [vmem:[#allocation3] sm:$0x1] %vm120, %v119
    $region21: #{tpu_custom_call.1} parent=1 // pred_fallthru
      _
    // Predicated region
    $region22: #{tpu_custom_call.1} parent=1 // pred_check
      _
    $region23: #{tpu_custom_call.1} parent=1 // pred_check_branch
      %123 = sbr.rel (0) target = $region25
    $region24: #{tpu_custom_call.1} parent=1 // pred_region
      %s125 = ssub.s32 16, 16
      %126 = vsyncadd [#allocation4], %s125
      %s128 = sshll.u32 [#allocation3], 4
      %s129 = int_to_ptr.vmem [resolvable:$true] %s128
      %131 = dma.vmem_to_hbm [thread:$0]  %s129, 16, %s3, [#allocation4]
    $region25: #{tpu_custom_call.1} parent=1 // pred_fallthru
      _
    // Predicated region
    $region26: #{tpu_custom_call.1} parent=1 // pred_check
      _
    $region27: #{tpu_custom_call.1} parent=1 // pred_check_branch
      %133 = sbr.rel (0) target = $region29
    $region28: #{tpu_custom_call.1} parent=1 // pred_region
      %134 = dma.done [#allocation4], 16
    $region29: #{tpu_custom_call.1} parent=1 // pred_fallthru
      _
    %135 = vsyncpa [#allocation4], 1

</llo_original>
